<compile_context>
chip_gen: v6e
topology: v6e:2x2x1
jax: 0.10.0
libtpu: 0.0.40
codegen_flags: <defaults>
</compile_context>

<pallas_src>
import jax
import jax.numpy as jnp
from jax.experimental import pallas as pl
from jax.experimental.pallas import tpu as pltpu


def _round_up(x, m):
    return (x + m - 1) // m * m


def _cdiv(a, b):
    return (a + b - 1) // b


def _vmem_capacity_bytes():
    try:
        info = pltpu.get_tpu_info()
        cap = getattr(info, "vmem_capacity_bytes", None)
        if cap:
            return int(cap)
    except Exception:
        pass
    return 64 * 1024 * 1024  # conservative fallback (v7x per-TC VMEM)


def _weight_spec(shape, index_map, multibuffer):
    """Weight BlockSpec; request 3-deep buffering on the streamed-weight path."""
    if multibuffer and hasattr(pl, "Buffered"):
        try:
            return pl.BlockSpec(shape, index_map, pipeline_mode=pl.Buffered(3))
        except TypeError:
            pass
    return pl.BlockSpec(shape, index_map)


# ----------------------------------------------------------------------------- kernels
def _ff_kernel_resident(x_ref, w1_ref, b1_ref, w2_ref, b2_ref, o_ref):
    # x_ref: (tm, Dp)  w1_ref: (Dp, Hp)  b1_ref: (1, Hp) f32
    # w2_ref: (Hp, Dp) b2_ref: (1, Dp) f32  o_ref: (tm, Dp)
    x = x_ref[...].astype(w1_ref.dtype)            # cast fused into the pipeline
    h = jnp.dot(x, w1_ref[...], preferred_element_type=jnp.float32)
    h = jnp.maximum(h + b1_ref[...], 0.0)          # bias + ReLU (dropout == identity)
    acc = jnp.dot(h.astype(w2_ref.dtype), w2_ref[...],
                  preferred_element_type=jnp.float32)
    o_ref[...] = (acc + b2_ref[...]).astype(o_ref.dtype)


def _ff_kernel_reduce(x_ref, w1_ref, b1_ref, w2_ref, b2_ref, o_ref, acc_ref):
    # Grid = (M tiles, H tiles); H is the reduction axis (axis 1, "arbitrary").
    k = pl.program_id(1)

    @pl.when(k == 0)
    def _():
        # Fold b2 into the accumulator init (saves a (tm, Dp) f32 add in the epilogue).
        acc_ref[...] = jnp.broadcast_to(b2_ref[...], acc_ref.shape)

    x = x_ref[...].astype(w1_ref.dtype)
    h = jnp.dot(x, w1_ref[...], preferred_element_type=jnp.float32)
    h = jnp.maximum(h + b1_ref[...], 0.0)
    acc_ref[...] += jnp.dot(h.astype(w2_ref.dtype), w2_ref[...],
                            preferred_element_type=jnp.float32)

    @pl.when(k == pl.num_programs(1) - 1)
    def _():
        o_ref[...] = acc_ref[...].astype(o_ref.dtype)


# ----------------------------------------------------------------------------- wrapper
def prepare_ff_weights(w1, b1, w2, b2, *, compute_dtype=None):
    """Pad (to 128-multiples) and optionally cast the FF parameters.

    In a real model this runs once per parameter set (hoist it out of the step
    function); the per-token path then only touches x.
    """
    D, H = w1.shape
    Dp = _round_up(D, 128)
    Hp = _round_up(H, 128)
    w_dtype = compute_dtype if compute_dtype is not None else w1.dtype
    w1p = w1.astype(w_dtype)
    w2p = w2.astype(w_dtype)
    if (Dp, Hp) != (D, H):
        w1p = jnp.pad(w1p, ((0, Dp - D), (0, Hp - H)))
        w2p = jnp.pad(w2p, ((0, Hp - H), (0, Dp - D)))
    b1p = b1.astype(jnp.float32).reshape(1, H)
    b2p = b2.astype(jnp.float32).reshape(1, D)
    if Hp != H:
        b1p = jnp.pad(b1p, ((0, 0), (0, Hp - H)))
    if Dp != D:
        b2p = jnp.pad(b2p, ((0, 0), (0, Dp - D)))
    return w1p, b1p, w2p, b2p


def ff_forward(x, w1, b1, w2, b2, *, tm=512, th=512, compute_dtype=None,
               force_reduction=False):
    """x: (B, S, D).  w1: (D, H), b1: (H,), w2: (H, D), b2: (D,).

    Weights are stored transposed from PyTorch (in_features, out_features) so the kernel
    computes y = relu(x @ W1 + b1) @ W2 + b2.  compute_dtype=jnp.bfloat16 is the fast
    path (f32 accumulation); default None keeps the module's f32 numerics.
    """
    B, S, D = x.shape
    H = w1.shape[1]
    M = B * S
    out_dtype = x.dtype

    w1p, b1p, w2p, b2p = prepare_ff_weights(w1, b1, w2, b2, compute_dtype=compute_dtype)
    Dp, Hp = w1p.shape

    x_item = jnp.dtype(x.dtype).itemsize
    w_item = jnp.dtype(w1p.dtype).itemsize
    out_item = jnp.dtype(out_dtype).itemsize

    # --- M tiling: multiples of 16 (bf16 sublane packing); at least 2 tiles when M is
    #     large enough so both TensorCores get work on the "parallel" M axis (v7x).
    tm = max(16, min(_round_up(tm, 16), _round_up(M, 16)))
    if _cdiv(M, tm) < 2 and M > 32:
        tm = max(16, _round_up(_cdiv(M, 2), 16))
    Mp = _round_up(M, tm)
    grid_m = Mp // tm

    vmem_cap = _vmem_capacity_bytes()
    vmem_cap_usable = min(int(vmem_cap * 0.85), 112 * 1024 * 1024)

    # VMEM for the resident-weight variant (weight windows counted double-buffered to be
    # conservative; includes the (tm, Hp) f32 intermediate and its cast copy).
    resident_bytes = (
        2 * tm * Dp * x_item
        + 2 * tm * Dp * out_item
        + 2 * 2 * Dp * Hp * w_item
        + 2 * 2 * (Hp + Dp) * 4
        + tm * Hp * 4 + tm * Hp * w_item
        + tm * Dp * 4
    )
    use_resident = (not force_reduction) and resident_bytes <= vmem_cap_usable

    if use_resident:
        grid = (grid_m,)
        in_specs = [
            pl.BlockSpec((tm, Dp), lambda i: (i, 0)),   # x tile (streamed over M)
            pl.BlockSpec((Dp, Hp), lambda i: (0, 0)),   # W1: fetched once, resident
            pl.BlockSpec((1, Hp), lambda i: (0, 0)),    # b1
            pl.BlockSpec((Hp, Dp), lambda i: (0, 0)),   # W2: fetched once, resident
            pl.BlockSpec((1, Dp), lambda i: (0, 0)),    # b2
        ]
        out_specs = pl.BlockSpec((tm, Dp), lambda i: (i, 0))
        scratch_shapes = []
        kernel = _ff_kernel_resident
        dim_sem = ("parallel",)
        weight_stream_factor = 1
        vmem_needed = resident_bytes
    else:
        # H-reduction fallback for weights too large to keep resident.
        align = 256 if Hp % 256 == 0 else 128          # match 256-wide MXU on v6e/v7x
        th = max(align, min(_round_up(th, align), Hp))
        Hp_r = _round_up(Hp, th)
        if Hp_r != Hp:
            w1p = jnp.pad(w1p, ((0, 0), (0, Hp_r - Hp)))
            b1p = jnp.pad(b1p, ((0, 0), (0, Hp_r - Hp)))
            w2p = jnp.pad(w2p, ((0, Hp_r - Hp), (0, 0)))
            Hp = Hp_r
        grid = (grid_m, Hp // th)
        in_specs = [
            pl.BlockSpec((tm, Dp), lambda i, k: (i, 0)),
            _weight_spec((Dp, th), lambda i, k: (0, k), multibuffer=True),
            pl.BlockSpec((1, th), lambda i, k: (0, k)),
            _weight_spec((th, Dp), lambda i, k: (k, 0), multibuffer=True),
            pl.BlockSpec((1, Dp), lambda i, k: (0, 0)),
        ]
        out_specs = pl.BlockSpec((tm, Dp), lambda i, k: (i, 0))
        scratch_shapes = [pltpu.VMEM((tm, Dp), jnp.float32)]
        kernel = _ff_kernel_reduce
        dim_sem = ("parallel", "arbitrary")
        weight_stream_factor = grid_m
        vmem_needed = (
            2 * tm * Dp * x_item
            + 2 * tm * Dp * out_item
            + 3 * (Dp * th + th * Dp) * w_item
            + 2 * 2 * (th + Dp) * 4
            + tm * th * 4 + tm * th * w_item
            + tm * Dp * 4
        )

    # x: no wrapper-side cast (cast happens in-kernel); pad only if actually needed.
    x2 = x.reshape(M, D)
    if Mp != M or Dp != D:
        x2 = jnp.pad(x2, ((0, Mp - M), (0, Dp - D)))

    cost = pl.CostEstimate(
        flops=4 * M * D * H,
        transcendentals=0,
        bytes_accessed=(Mp * Dp * x_item
                        + weight_stream_factor * 2 * Dp * Hp * w_item
                        + (Hp + Dp) * 4
                        + Mp * Dp * out_item),
    )

    vmem_limit = int(min(max(int(vmem_needed * 1.25), 32 * 1024 * 1024),
                         vmem_cap_usable))

    out = pl.pallas_call(
        kernel,
        out_shape=jax.ShapeDtypeStruct((Mp, Dp), out_dtype),
        grid_spec=pltpu.PrefetchScalarGridSpec(
            num_scalar_prefetch=0,
            grid=grid,
            in_specs=in_specs,
            out_specs=out_specs,
            scratch_shapes=scratch_shapes,
        ),
        compiler_params=pltpu.CompilerParams(
            dimension_semantics=dim_sem,
            vmem_limit_bytes=vmem_limit,
        ),
        cost_estimate=cost,
    )(x2, w1p, b1p, w2p, b2p)
    return out[:M, :D].reshape(B, S, D)


def ff_reference(x, w1, b1, w2, b2):
    h = jnp.maximum(x @ w1 + b1, 0.0)
    return h @ w2 + b2


if __name__ == "__main__":
    key = jax.random.PRNGKey(0)

    # --- Small shapes consistent with the module: batch=2, seq=8, input=32, hidden=64.
    B, S, D, H = 2, 8, 32, 64
    kx, k1, k2, k3, k4, key = jax.random.split(key, 6)
    x = jax.random.normal(kx, (B, S, D), dtype=jnp.float32)
    w1 = jax.random.normal(k1, (D, H), dtype=jnp.float32) * (1.0 / jnp.sqrt(D))
    b1 = jax.random.normal(k2, (H,), dtype=jnp.float32) * 0.5
    w2 = jax.random.normal(k3, (H, D), dtype=jnp.float32) * (1.0 / jnp.sqrt(H))
    b2 = jax.random.normal(k4, (D,), dtype=jnp.float32) * 0.5

    y = ff_forward(x, w1, b1, w2, b2)
    jax.block_until_ready(y)
    y_ref = ff_reference(x, w1, b1, w2, b2)
    assert y.shape == (B, S, D)
    assert jnp.allclose(y, y_ref, atol=1e-2, rtol=1e-2), "mismatch vs reference (small)"

    # --- Larger shape: exercises M tiling / megacore split on the resident-weight path.
    B2, S2, D2, H2 = 2, 128, 256, 512
    kx, k1, k2, k3, k4, key = jax.random.split(key, 6)
    x_l = jax.random.normal(kx, (B2, S2, D2), dtype=jnp.float32)
    w1_l = jax.random.normal(k1, (D2, H2), dtype=jnp.float32) * (1.0 / jnp.sqrt(D2))
    b1_l = jax.random.normal(k2, (H2,), dtype=jnp.float32) * 0.5
    w2_l = jax.random.normal(k3, (H2, D2), dtype=jnp.float32) * (1.0 / jnp.sqrt(H2))
    b2_l = jax.random.normal(k4, (D2,), dtype=jnp.float32) * 0.5
    y_l_ref = ff_reference(x_l, w1_l, b1_l, w2_l, b2_l)

    y_l = ff_forward(x_l, w1_l, b1_l, w2_l, b2_l)         # resident-weight path, grid (2,)
    jax.block_until_ready(y_l)
    assert jnp.allclose(y_l, y_l_ref, atol=3e-2, rtol=3e-2), "mismatch (resident f32)"

    # --- Forced H-reduction fallback path (accumulator + b2 folding + Buffered weights).
    y_r = ff_forward(x_l, w1_l, b1_l, w2_l, b2_l, tm=128, th=256, force_reduction=True)
    jax.block_until_ready(y_r)
    assert jnp.allclose(y_r, y_l_ref, atol=3e-2, rtol=3e-2), "mismatch (reduction f32)"

    # --- bf16 compute path (f32 accumulation), loose tolerance vs f32 reference.
    y_bf = ff_forward(x_l, w1_l, b1_l, w2_l, b2_l, compute_dtype=jnp.bfloat16)
    jax.block_until_ready(y_bf)
    assert jnp.allclose(y_bf, y_l_ref, atol=1e-1, rtol=1e-1), "mismatch (bf16)"

    print("KERNEL_OK")
</pallas_src>

<mosaic_0001>
module attributes {stable_mosaic.version = 11 : i64} {
  func.func @_ff_kernel_resident(%arg0: i32, %arg1: memref<16x128xf32, #tpu.memory_space<vmem>>, %arg2: memref<128x128xf32, #tpu.memory_space<vmem>>, %arg3: memref<1x128xf32, #tpu.memory_space<vmem>>, %arg4: memref<128x128xf32, #tpu.memory_space<vmem>>, %arg5: memref<1x128xf32, #tpu.memory_space<vmem>>, %arg6: memref<16x128xf32, #tpu.memory_space<vmem>>) attributes {dimension_semantics = [#tpu.dimension_semantics<parallel>], iteration_bounds = array<i64: 1>, scalar_prefetch = 0 : i64, scratch_operands = 0 : i64, tpu.core_type = #tpu.core_type<tc>, window_params = [{transform_indices = @transform_0, window_bounds = array<i64: 16, 128>}, {pipeline_mode = #tpu.pipeline_mode<synchronous>, transform_indices = @transform_1, window_bounds = array<i64: 128, 128>}, {pipeline_mode = #tpu.pipeline_mode<synchronous>, transform_indices = @transform_2, window_bounds = array<i64: 1, 128>}, {pipeline_mode = #tpu.pipeline_mode<synchronous>, transform_indices = @transform_3, window_bounds = array<i64: 128, 128>}, {pipeline_mode = #tpu.pipeline_mode<synchronous>, transform_indices = @transform_4, window_bounds = array<i64: 1, 128>}, {transform_indices = @transform_5, window_bounds = array<i64: 16, 128>}]} {
    %c0 = arith.constant 0 : index
    %c0_0 = arith.constant 0 : index
    %0 = vector.load %arg1[%c0, %c0_0] : memref<16x128xf32, #tpu.memory_space<vmem>>, vector<16x128xf32>
    %c0_1 = arith.constant 0 : index
    %c0_2 = arith.constant 0 : index
    %1 = vector.load %arg2[%c0_1, %c0_2] : memref<128x128xf32, #tpu.memory_space<vmem>>, vector<128x128xf32>
    %cst = arith.constant dense<0.000000e+00> : vector<16x128xf32>
    %2 = tpu.matmul %0, %1, %cst {dimension_numbers = #tpu.dot_dimension_numbers<[1], [0], [0], [1], [0, 0, 1, 1], [], []>} : vector<16x128xf32>, vector<128x128xf32>, vector<16x128xf32> -> vector<16x128xf32>
    %c0_3 = arith.constant 0 : index
    %c0_4 = arith.constant 0 : index
    %3 = vector.load %arg3[%c0_3, %c0_4] : memref<1x128xf32, #tpu.memory_space<vmem>>, vector<1x128xf32>
    %4 = vector.broadcast %3 : vector<1x128xf32> to vector<16x128xf32>
    %5 = arith.addf %2, %4 : vector<16x128xf32>
    %cst_5 = arith.constant 0.000000e+00 : f32
    %6 = vector.broadcast %cst_5 : f32 to vector<16x128xf32>
    %7 = arith.maximumf %5, %6 : vector<16x128xf32>
    %c0_6 = arith.constant 0 : index
    %c0_7 = arith.constant 0 : index
    %8 = vector.load %arg4[%c0_6, %c0_7] : memref<128x128xf32, #tpu.memory_space<vmem>>, vector<128x128xf32>
    %cst_8 = arith.constant dense<0.000000e+00> : vector<16x128xf32>
    %9 = tpu.matmul %7, %8, %cst_8 {dimension_numbers = #tpu.dot_dimension_numbers<[1], [0], [0], [1], [0, 0, 1, 1], [], []>} : vector<16x128xf32>, vector<128x128xf32>, vector<16x128xf32> -> vector<16x128xf32>
    %c0_9 = arith.constant 0 : index
    %c0_10 = arith.constant 0 : index
    %10 = vector.load %arg5[%c0_9, %c0_10] : memref<1x128xf32, #tpu.memory_space<vmem>>, vector<1x128xf32>
    %11 = vector.broadcast %10 : vector<1x128xf32> to vector<16x128xf32>
    %12 = arith.addf %9, %11 : vector<16x128xf32>
    %c0_11 = arith.constant 0 : index
    %c0_12 = arith.constant 0 : index
    %13 = vector.load %arg6[%c0_11, %c0_12] : memref<16x128xf32, #tpu.memory_space<vmem>>, vector<16x128xf32>
    tpu.vector_store %arg6[%c0_11, %c0_12], %12 {strides = array<i32>} : memref<16x128xf32, #tpu.memory_space<vmem>>, vector<16x128xf32>,
    return
  }
  func.func @transform_0(%arg0: i32) -> (i32, i32) {
    %c0_i32 = arith.constant 0 : i32
    %c0_i32_0 = arith.constant 0 : i32
    return %arg0, %c0_i32 : i32, i32
  }
  func.func @transform_1(%arg0: i32) -> (i32, i32) {
    %c0_i32 = arith.constant 0 : i32
    %c0_i32_0 = arith.constant 0 : i32
    %c0_i32_1 = arith.constant 0 : i32
    return %c0_i32, %c0_i32_0 : i32, i32
  }
  func.func @transform_2(%arg0: i32) -> (i32, i32) {
    %c0_i32 = arith.constant 0 : i32
    %c0_i32_0 = arith.constant 0 : i32
    %c0_i32_1 = arith.constant 0 : i32
    return %c0_i32, %c0_i32_0 : i32, i32
  }
  func.func @transform_3(%arg0: i32) -> (i32, i32) {
    %c0_i32 = arith.constant 0 : i32
    %c0_i32_0 = arith.constant 0 : i32
    %c0_i32_1 = arith.constant 0 : i32
    return %c0_i32, %c0_i32_0 : i32, i32
  }
  func.func @transform_4(%arg0: i32) -> (i32, i32) {
    %c0_i32 = arith.constant 0 : i32
    %c0_i32_0 = arith.constant 0 : i32
    %c0_i32_1 = arith.constant 0 : i32
    return %c0_i32, %c0_i32_0 : i32, i32
  }
  func.func @transform_5(%arg0: i32) -> (i32, i32) {
    %c0_i32 = arith.constant 0 : i32
    %c0_i32_0 = arith.constant 0 : i32
    return %arg0, %c0_i32 : i32, i32
  }
}

</mosaic_0001>

<llo_original>
// kernel: tpu_custom_call.1
$region0: #{tpu_custom_call.1}
  #allocation0 [shape = 'u32[]', space=smem, size = 0x4, offset = 0x4, fixed_abs, tag = 'smem constant byte address 0x4 - core index']
  #allocation1 [shape = 'u32[144,128]{1,0:T(1,128)}', space=vmem, size = 0x12000, scoped, tag = 'internal scratch']
  %s0 = inlined_call_operand.hbm [shape: f32[16,128], index: 0, kind: input, shape index: {}]
  %s1 = inlined_call_operand.hbm [shape: f32[128,128], index: 1, kind: input, shape index: {}]
  %s2 = inlined_call_operand.vmem [shape: f32[1,128], index: 2, kind: input, shape index: {}]
  %s3 = inlined_call_operand.hbm [shape: f32[128,128], index: 3, kind: input, shape index: {}]
  %s4 = inlined_call_operand.vmem [shape: f32[1,128], index: 4, kind: input, shape index: {}]
  %s5 = inlined_call_operand.hbm [shape: f32[16,128], index: 5, kind: output, shape index: {}]
  %s6 = sld [smem:[#allocation0]]
  $region42: #{tpu_custom_call.1} parent=0
    _
  %s8 = ssub.s32 1, %s6
  %s9 = scalar_select 0, %s8, %s6
  $region1: #{tpu_custom_call.1} parent=0
    #allocation2 [shape = 'u8[8192]{0}', space=vmem, size = 0x2000, scoped, tag = 'input window, operand 0, single buffered']
    #allocation3 [shape = 's32[1]{0}', space=sflag, size = 0x4, scoped, tag = 'scoped memory for tpu_custom_call.1']
    #allocation4 [shape = 's32[1]{0}', space=sflag, size = 0x4, scoped, tag = 'scoped memory for tpu_custom_call.1']
    #allocation5 [shape = 'u8[65536]{0}', space=vmem, size = 0x10000, scoped, tag = 'input window, operand 1, single buffered']
    #allocation6 [shape = 's32[1]{0}', space=sflag, size = 0x4, scoped, tag = 'scoped memory for tpu_custom_call.1']
    #allocation7 [shape = 'u8[65536]{0}', space=vmem, size = 0x10000, scoped, tag = 'input window, operand 3, single buffered']
    #allocation8 [shape = 'u8[8192]{0}', space=vmem, size = 0x2000, scoped, tag = 'output window, operand 0, single buffered']
    %10 = vsyncpa [#allocation3], 0
    %11 = vsyncpa [#allocation6], 0
    %12 = vsyncpa [#allocation4], 0
    // Predicated region
    $region2: #{tpu_custom_call.1} parent=1 // pred_check
      _
    $region3: #{tpu_custom_call.1} parent=1 // pred_check_branch
      %14 = sbr.rel (0) target = $region5
    $region4: #{tpu_custom_call.1} parent=1 // pred_region
      %s16 = ssub.s32 256, 256
      %17 = vsyncadd [#allocation3], %s16
      %s18 = sshll.u32 [#allocation2], 4
      %s19 = int_to_ptr.vmem [resolvable:$true] %s18
      %24 = dma.hbm_to_vmem [thread:$0]  %s0, 256, %s19, [#allocation3], 128, 128, 8
    $region5: #{tpu_custom_call.1} parent=1 // pred_fallthru
      _
    // Predicated region
    $region6: #{tpu_custom_call.1} parent=1 // pred_check
      _
    $region7: #{tpu_custom_call.1} parent=1 // pred_check_branch
      %26 = sbr.rel (0) target = $region9
    $region8: #{tpu_custom_call.1} parent=1 // pred_region
      %s28 = ssub.s32 2048, 2048
      %29 = vsyncadd [#allocation6], %s28
      %s30 = sshll.u32 [#allocation5], 4
      %s31 = int_to_ptr.vmem [resolvable:$true] %s30
      %36 = dma.hbm_to_vmem [thread:$0]  %s1, 2048, %s31, [#allocation6], 128, 128, 8
    $region9: #{tpu_custom_call.1} parent=1 // pred_fallthru
      _
    // Predicated region
    $region10: #{tpu_custom_call.1} parent=1 // pred_check
      _
    $region11: #{tpu_custom_call.1} parent=1 // pred_check_branch
      %38 = sbr.rel (0) target = $region13
    $region12: #{tpu_custom_call.1} parent=1 // pred_region
      _
    $region13: #{tpu_custom_call.1} parent=1 // pred_fallthru
      _
    // Predicated region
    $region14: #{tpu_custom_call.1} parent=1 // pred_check
      _
    $region15: #{tpu_custom_call.1} parent=1 // pred_check_branch
      %40 = sbr.rel (0) target = $region17
    $region16: #{tpu_custom_call.1} parent=1 // pred_region
      %s42 = ssub.s32 2048, 2048
      %43 = vsyncadd [#allocation6], %s42
      %s44 = sshll.u32 [#allocation7], 4
      %s45 = int_to_ptr.vmem [resolvable:$true] %s44
      %50 = dma.hbm_to_vmem [thread:$0]  %s3, 2048, %s45, [#allocation6], 128, 128, 8
    $region17: #{tpu_custom_call.1} parent=1 // pred_fallthru
      _
    // Predicated region
    $region18: #{tpu_custom_call.1} parent=1 // pred_check
      _
    $region19: #{tpu_custom_call.1} parent=1 // pred_check_branch
      %52 = sbr.rel (0) target = $region21
    $region20: #{tpu_custom_call.1} parent=1 // pred_region
      _
    $region21: #{tpu_custom_call.1} parent=1 // pred_fallthru
      _
    // Predicated region
    $region22: #{tpu_custom_call.1} parent=1 // pred_check
      _
    $region23: #{tpu_custom_call.1} parent=1 // pred_check_branch
      %54 = sbr.rel (0) target = $region25
    $region24: #{tpu_custom_call.1} parent=1 // pred_region
      %55 = dma.done [#allocation3], 256
    $region25: #{tpu_custom_call.1} parent=1 // pred_fallthru
      _
    // Predicated region
    $region26: #{tpu_custom_call.1} parent=1 // pred_check
      _
    $region27: #{tpu_custom_call.1} parent=1 // pred_check_branch
      %57 = sbr.rel (0) target = $region29
    $region28: #{tpu_custom_call.1} parent=1 // pred_region
      %58 = dma.done [#allocation6], 2048
    $region29: #{tpu_custom_call.1} parent=1 // pred_fallthru
      _
    // Predicated region
    $region30: #{tpu_custom_call.1} parent=1 // pred_check
      _
    $region31: #{tpu_custom_call.1} parent=1 // pred_check_branch
      %60 = sbr.rel (0) target = $region33
    $region32: #{tpu_custom_call.1} parent=1 // pred_region
      %61 = dma.done [#allocation6], 2048
    $region33: #{tpu_custom_call.1} parent=1 // pred_fallthru
      _
    %v62 = vld [vmem:[#allocation2] sm:$0xff]
    %v63 = vld [vmem:[#allocation2 + $0x8] sm:$0xff]
    %v64 = vld [vmem:[#allocation5] sm:$0xff]
    %v65 = vld [vmem:[#allocation5 + $0x8] sm:$0xff]
    %v66 = vld [vmem:[#allocation5 + $0x10] sm:$0xff]
    %v67 = vld [vmem:[#allocation5 + $0x18] sm:$0xff]
    %v68 = vld [vmem:[#allocation5 + $0x20] sm:$0xff]
    %v69 = vld [vmem:[#allocation5 + $0x28] sm:$0xff]
    %v70 = vld [vmem:[#allocation5 + $0x30] sm:$0xff]
    %v71 = vld [vmem:[#allocation5 + $0x38] sm:$0xff]
    %v72 = vld [vmem:[#allocation5 + $0x40] sm:$0xff]
    %v73 = vld [vmem:[#allocation5 + $0x48] sm:$0xff]
    %v74 = vld [vmem:[#allocation5 + $0x50] sm:$0xff]
    %v75 = vld [vmem:[#allocation5 + $0x58] sm:$0xff]
    %v76 = vld [vmem:[#allocation5 + $0x60] sm:$0xff]
    %v77 = vld [vmem:[#allocation5 + $0x68] sm:$0xff]
    %v78 = vld [vmem:[#allocation5 + $0x70] sm:$0xff]
    %v79 = vld [vmem:[#allocation5 + $0x78] sm:$0xff]
    %v80 = vld [vmem:[%s2] sm:$0x1]
    %v82 = vlaneseq
    %v83 = vshrl.u32 %v82, 7
    %v84 = vsub.s32 0, %v83
    %v85 = vrot.slane %v80, %v84
    %87 = vmatprep.subr.mxu0 0.0
    %88 = vmatpush1.msra.mxu0 %v79
    %89 = vmatprep.subr.mxu0 0.0
    %90 = vmatpush1.msra.mxu0 %v78
    %91 = vmatprep.subr.mxu0 0.0
    %92 = vmatpush1.msra.mxu0 %v77
    %93 = vmatprep.subr.mxu0 0.0
    %94 = vmatpush1.msra.mxu0 %v76
    %95 = vmatprep.subr.mxu0 0.0
    %96 = vmatpush1.msra.mxu0 %v75
    %97 = vmatprep.subr.mxu0 0.0
    %98 = vmatpush1.msra.mxu0 %v74
    %99 = vmatprep.subr.mxu0 0.0
    %100 = vmatpush1.msra.mxu0 %v73
    %101 = vmatprep.subr.mxu0 0.0
    %102 = vmatpush1.msra.mxu0 %v72
    %103 = vmatprep.subr.mxu0 0.0
    %104 = vmatpush1.msra.mxu0 %v71
    %105 = vmatprep.subr.mxu0 0.0
    %106 = vmatpush1.msra.mxu0 %v70
    %107 = vmatprep.subr.mxu0 0.0
    %108 = vmatpush1.msra.mxu0 %v69
    %109 = vmatprep.subr.mxu0 0.0
    %110 = vmatpush1.msra.mxu0 %v68
    %111 = vmatprep.subr.mxu0 0.0
    %112 = vmatpush1.msra.mxu0 %v67
    %113 = vmatprep.subr.mxu0 0.0
    %114 = vmatpush1.msra.mxu0 %v66
    %115 = vmatprep.subr.mxu0 0.0
    %116 = vmatpush1.msra.mxu0 %v65
    %117 = vmatprep.subr.mxu0 0.0
    %118 = vmatpush1.msra.mxu0 %v64
    %119 = vmatprep.subr.mxu0 0.0
    %120 = vmatpush2.msra.mxu0 0.0
    %121 = vmatprep.subr.mxu0 0.0
    %122 = vmatpush2.msra.mxu0 0.0
    %123 = vmatprep.subr.mxu0 0.0
    %124 = vmatpush2.msra.mxu0 0.0
    %125 = vmatprep.subr.mxu0 0.0
    %126 = vmatpush2.msra.mxu0 0.0
    %127 = vmatprep.subr.mxu0 0.0
    %128 = vmatpush2.msra.mxu0 0.0
    %129 = vmatprep.subr.mxu0 0.0
    %130 = vmatpush2.msra.mxu0 0.0
    %131 = vmatprep.subr.mxu0 0.0
    %132 = vmatpush2.msra.mxu0 0.0
    %133 = vmatprep.subr.mxu0 0.0
    %134 = vmatpush2.msra.mxu0 0.0
    %135 = vmatprep.subr.mxu0 0.0
    %136 = vmatpush2.msra.mxu0 0.0
    %137 = vmatprep.subr.mxu0 0.0
    %138 = vmatpush2.msra.mxu0 0.0
    %139 = vmatprep.subr.mxu0 0.0
    %140 = vmatpush2.msra.mxu0 0.0
    %141 = vmatprep.subr.mxu0 0.0
    %142 = vmatpush2.msra.mxu0 0.0
    %143 = vmatprep.subr.mxu0 0.0
    %144 = vmatpush2.msra.mxu0 0.0
    %145 = vmatprep.subr.mxu0 0.0
    %146 = vmatpush2.msra.mxu0 0.0
    %147 = vmatprep.subr.mxu0 0.0
    %148 = vmatpush2.msra.mxu0 0.0
    %149 = vmatprep.subr.mxu0 0.0
    %150 = vmatpush2.msra.mxu0 0.0
    %151 = vmatprep.mubr.f32.mxu0 0.0
    %152 = vmatmul.mubr.f32.gmra.mxu0 %v62
    %v153 = vpop.f32.mrf.mxu0
    %v154 = vadd.f32 %v85, %v153
    %v155 = vpop.f32.mrf.mxu0
    %156 = vmatprep.mubr.f32.mxu0 0.0
    %157 = vmatmul.mubr.f32.gmra.mxu0 %v63
    %v158 = vpop.f32.mrf.mxu0
    %v159 = vadd.f32 %v85, %v158
    %v160 = vpop.f32.mrf.mxu0
    %161 = vdwg.mxu0
    %v162 = vmax.f32 %v154, 0.0
    %v163 = vmax.f32 %v159, 0.0
    %v164 = vld [vmem:[#allocation7] sm:$0xff]
    %v165 = vld [vmem:[#allocation7 + $0x8] sm:$0xff]
    %v166 = vld [vmem:[#allocation7 + $0x10] sm:$0xff]
    %v167 = vld [vmem:[#allocation7 + $0x18] sm:$0xff]
    %v168 = vld [vmem:[#allocation7 + $0x20] sm:$0xff]
    %v169 = vld [vmem:[#allocation7 + $0x28] sm:$0xff]
    %v170 = vld [vmem:[#allocation7 + $0x30] sm:$0xff]
    %v171 = vld [vmem:[#allocation7 + $0x38] sm:$0xff]
    %v172 = vld [vmem:[#allocation7 + $0x40] sm:$0xff]
    %v173 = vld [vmem:[#allocation7 + $0x48] sm:$0xff]
    %v174 = vld [vmem:[#allocation7 + $0x50] sm:$0xff]
    %v175 = vld [vmem:[#allocation7 + $0x58] sm:$0xff]
    %v176 = vld [vmem:[#allocation7 + $0x60] sm:$0xff]
    %v177 = vld [vmem:[#allocation7 + $0x68] sm:$0xff]
    %v178 = vld [vmem:[#allocation7 + $0x70] sm:$0xff]
    %v179 = vld [vmem:[#allocation7 + $0x78] sm:$0xff]
    %v180 = vld [vmem:[%s4] sm:$0x1]
    %v182 = vlaneseq
    %v183 = vshrl.u32 %v182, 7
    %v184 = vsub.s32 0, %v183
    %v185 = vrot.slane %v180, %v184
    %187 = vmatprep.subr.mxu0 0.0
    %188 = vmatpush1.msra.mxu0 %v179
    %189 = vmatprep.subr.mxu0 0.0
    %190 = vmatpush1.msra.mxu0 %v178
    %191 = vmatprep.subr.mxu0 0.0
    %192 = vmatpush1.msra.mxu0 %v177
    %193 = vmatprep.subr.mxu0 0.0
    %194 = vmatpush1.msra.mxu0 %v176
    %195 = vmatprep.subr.mxu0 0.0
    %196 = vmatpush1.msra.mxu0 %v175
    %197 = vmatprep.subr.mxu0 0.0
    %198 = vmatpush1.msra.mxu0 %v174
    %199 = vmatprep.subr.mxu0 0.0
    %200 = vmatpush1.msra.mxu0 %v173
    %201 = vmatprep.subr.mxu0 0.0
    %202 = vmatpush1.msra.mxu0 %v172
    %203 = vmatprep.subr.mxu0 0.0
    %204 = vmatpush1.msra.mxu0 %v171
    %205 = vmatprep.subr.mxu0 0.0
    %206 = vmatpush1.msra.mxu0 %v170
    %207 = vmatprep.subr.mxu0 0.0
    %208 = vmatpush1.msra.mxu0 %v169
    %209 = vmatprep.subr.mxu0 0.0
    %210 = vmatpush1.msra.mxu0 %v168
    %211 = vmatprep.subr.mxu0 0.0
    %212 = vmatpush1.msra.mxu0 %v167
    %213 = vmatprep.subr.mxu0 0.0
    %214 = vmatpush1.msra.mxu0 %v166
    %215 = vmatprep.subr.mxu0 0.0
    %216 = vmatpush1.msra.mxu0 %v165
    %217 = vmatprep.subr.mxu0 0.0
    %218 = vmatpush1.msra.mxu0 %v164
    %219 = vmatprep.subr.mxu0 0.0
    %220 = vmatpush2.msra.mxu0 0.0
    %221 = vmatprep.subr.mxu0 0.0
    %222 = vmatpush2.msra.mxu0 0.0
    %223 = vmatprep.subr.mxu0 0.0
    %224 = vmatpush2.msra.mxu0 0.0
    %225 = vmatprep.subr.mxu0 0.0
    %226 = vmatpush2.msra.mxu0 0.0
    %227 = vmatprep.subr.mxu0 0.0
    %228 = vmatpush2.msra.mxu0 0.0
    %229 = vmatprep.subr.mxu0 0.0
    %230 = vmatpush2.msra.mxu0 0.0
    %231 = vmatprep.subr.mxu0 0.0
    %232 = vmatpush2.msra.mxu0 0.0
    %233 = vmatprep.subr.mxu0 0.0
    %234 = vmatpush2.msra.mxu0 0.0
    %235 = vmatprep.subr.mxu0 0.0
    %236 = vmatpush2.msra.mxu0 0.0
    %237 = vmatprep.subr.mxu0 0.0
    %238 = vmatpush2.msra.mxu0 0.0
    %239 = vmatprep.subr.mxu0 0.0
    %240 = vmatpush2.msra.mxu0 0.0
    %241 = vmatprep.subr.mxu0 0.0
    %242 = vmatpush2.msra.mxu0 0.0
    %243 = vmatprep.subr.mxu0 0.0
    %244 = vmatpush2.msra.mxu0 0.0
    %245 = vmatprep.subr.mxu0 0.0
    %246 = vmatpush2.msra.mxu0 0.0
    %247 = vmatprep.subr.mxu0 0.0
    %248 = vmatpush2.msra.mxu0 0.0
    %249 = vmatprep.subr.mxu0 0.0
    %250 = vmatpush2.msra.mxu0 0.0
    %251 = vmatprep.mubr.f32.mxu0 0.0
    %252 = vmatmul.mubr.f32.gmra.mxu0 %v162
    %v253 = vpop.f32.mrf.mxu0
    %v254 = vadd.f32 %v185, %v253
    %v255 = vpop.f32.mrf.mxu0
    %256 = vmatprep.mubr.f32.mxu0 0.0
    %257 = vmatmul.mubr.f32.gmra.mxu0 %v163
    %v258 = vpop.f32.mrf.mxu0
    %v259 = vadd.f32 %v185, %v258
    %v260 = vpop.f32.mrf.mxu0
    %261 = vdwg.mxu0
    %262 = vst [vmem:[#allocation8] sm:$0xff] %v254
    %263 = vst [vmem:[#allocation8 + $0x8] sm:$0xff] %v259
    // Predicated region
    $region34: #{tpu_custom_call.1} parent=1 // pred_check
      _
    $region35: #{tpu_custom_call.1} parent=1 // pred_check_branch
      %265 = sbr.rel (0) target = $region37
    $region36: #{tpu_custom_call.1} parent=1 // pred_region
      %s267 = ssub.s32 256, 256
      %268 = vsyncadd [#allocation4], %s267
      %s269 = sshll.u32 [#allocation8], 4
      %s270 = int_to_ptr.vmem [resolvable:$true] %s269
      %275 = dma.vmem_to_hbm [thread:$0]  %s270, 256, %s5, [#allocation4], 128, 128, 8
    $region37: #{tpu_custom_call.1} parent=1 // pred_fallthru
      _
    // Predicated region
    $region38: #{tpu_custom_call.1} parent=1 // pred_check
      _
    $region39: #{tpu_custom_call.1} parent=1 // pred_check_branch
      %277 = sbr.rel (0) target = $region41
    $region40: #{tpu_custom_call.1} parent=1 // pred_region
      %278 = dma.done [#allocation4], 256
    $region41: #{tpu_custom_call.1} parent=1 // pred_fallthru
      _
    %279 = vsyncpa [#allocation3], 1
    %280 = vsyncpa [#allocation6], 1
    %281 = vsyncpa [#allocation4], 1

</llo_original>
